<compile_context>
chip_gen: v7x
topology: tpu7x:2x2x1
jax: 0.10.0
libtpu: 0.0.40
codegen_flags: <defaults>
</compile_context>

<pallas_src>
import functools

import jax
import jax.numpy as jnp
from jax.experimental import pallas as pl
from jax.experimental.pallas import tpu as pltpu

_TM_MAX = 1024   # preferred rows (N*H*W pixels) per grid step
_TM_MIN = 128    # floor; below this per-step overhead dominates anyway
_MIN_STEPS = 8   # keep >= 8 grid steps when the problem allows (v7x: 2 TCs)
_LANES = 128     # lane-dense width for intermediates and output


def _choose_tm(m):
    """Largest power-of-two row tile <= _TM_MAX keeping >= _MIN_STEPS grid
    steps when the problem is big enough (never below _TM_MIN)."""
    tm = _TM_MAX
    while tm > _TM_MIN and pl.cdiv(m, tm) < _MIN_STEPS:
        tm //= 2
    return tm


def _fused_stem_kernel(p_ref, w1_ref, b1_ref, w2_ref, b2_ref, o_ref, *, half):
    """p_ref : (TM, 9*Cin)    bf16 im2col patches (both streams concatenated)
    w1_ref : (9*Cin, 2*half)  bf16 block-diag 3x3 weights (rgb -> [0:C], mo -> [half:half+C])
    b1_ref : (1, 2*half)      f32  per-stream biases, same lane layout
    w2_ref : (half, CPAD)     bf16 1x1 fuse weight in rows [0:C], zero-padded
    b2_ref : (1, CPAD)        f32  fuse bias, zero-padded
    o_ref  : (TM, CPAD)       bf16 lane-dense output tile
    """
    # 3x3 conv for BOTH streams in one MXU contraction (K = 9*Cin).
    y = jnp.dot(p_ref[...], w1_ref[...], preferred_element_type=jnp.float32)
    # per-stream bias + ReLU (lane halves hold the two streams; pad lanes stay 0)
    y = jnp.maximum(y + b1_ref[...], 0.0)
    # stream add on the VPU (one lane shift + add), then the 1x1 fuse conv as a
    # single bf16 MXU pass with f32 accumulation.
    f = y[:, :half] + y[:, half:]
    z = jnp.dot(f.astype(jnp.bfloat16), w2_ref[...],
                preferred_element_type=jnp.float32)
    o_ref[...] = jnp.maximum(z + b2_ref[...], 0.0).astype(o_ref.dtype)


@jax.jit
def amma_backbone_forward(input_rgb, input_mo, params):
    """input_rgb: (N, Crgb, H, W), input_mo: (N, Cmo, H, W)  [NCHW, as PyTorch].

    Returns fused feature map (N, C, H, W) in NCHW, f32.
    """
    w_rgb, b_rgb, w_mo, b_mo, w_fuse, b_fuse = params
    N, c_rgb, H, W = input_rgb.shape
    _, c_mo, _, _ = input_mo.shape
    C = w_rgb.shape[-1]
    cin = c_rgb + c_mo
    k1 = 9 * cin
    half = (pl.cdiv(2 * C, _LANES) * _LANES) // 2   # lane half-width, >= C
    c2 = 2 * half                                   # padded intermediate width
    cpad = pl.cdiv(C, _LANES) * _LANES              # lane-dense output width

    # --- wrapper-side glue (fused by XLA into one producer pass) -------------
    # NCHW -> NHWC, channel-concat the two streams, bf16 matmul operands.
    x = jnp.concatenate(
        [jnp.transpose(input_rgb, (0, 2, 3, 1)),
         jnp.transpose(input_mo, (0, 2, 3, 1))], axis=-1).astype(jnp.bfloat16)
    xp = jnp.pad(x, ((0, 0), (1, 1), (1, 1), (0, 0)))
    # im2col: channel layout = tap (dy,dx) major, input channel minor.
    # TODO(synk): move this im2col in-kernel (row-strip halo DMA) for large H*W.
    cols = [xp[:, dy:dy + H, dx:dx + W, :] for dy in range(3) for dx in range(3)]
    patches = jnp.concatenate(cols, axis=-1).reshape(N * H * W, k1)

    m = N * H * W
    tm = _choose_tm(m)
    m_pad = pl.cdiv(m, tm) * tm
    if m_pad > m:
        patches = jnp.pad(patches, ((0, m_pad - m), (0, 0)))

    # Block-diagonal 3x3 weight: rgb -> out lanes [0:C], mo -> [half:half+C].
    w1 = jnp.zeros((3, 3, cin, c2), jnp.float32)
    w1 = w1.at[:, :, :c_rgb, :C].set(w_rgb)
    w1 = w1.at[:, :, c_rgb:, half:half + C].set(w_mo)
    w1 = w1.reshape(k1, c2).astype(jnp.bfloat16)
    b1 = jnp.zeros((c2,), jnp.float32)
    b1 = b1.at[:C].set(b_rgb.reshape(-1)).at[half:half + C].set(b_mo.reshape(-1))
    b1 = b1.reshape(1, c2)
    # Single 1x1 fuse weight (stream add happens on the VPU in-kernel),
    # zero-padded to a lane-dense (half, cpad) bf16 operand.
    w2 = jnp.zeros((half, cpad), jnp.float32).at[:C, :C].set(w_fuse)
    w2 = w2.astype(jnp.bfloat16)
    b2 = jnp.pad(b_fuse.reshape(-1), (0, cpad - C)).reshape(1, cpad).astype(jnp.float32)

    # --- pallas call ---------------------------------------------------------
    flops = 2 * m_pad * (k1 * c2 + half * cpad)
    bytes_accessed = (m_pad * k1 * 2 + k1 * c2 * 2 + c2 * 4
                      + half * cpad * 2 + cpad * 4 + m_pad * cpad * 2)

    out = pl.pallas_call(
        functools.partial(_fused_stem_kernel, half=half),
        out_shape=jax.ShapeDtypeStruct((m_pad, cpad), jnp.bfloat16),
        grid_spec=pltpu.PrefetchScalarGridSpec(
            num_scalar_prefetch=0,
            grid=(m_pad // tm,),
            in_specs=[
                pl.BlockSpec((tm, k1), lambda i: (i, 0)),
                pl.BlockSpec((k1, c2), lambda i: (0, 0)),
                pl.BlockSpec((1, c2), lambda i: (0, 0)),
                pl.BlockSpec((half, cpad), lambda i: (0, 0)),
                pl.BlockSpec((1, cpad), lambda i: (0, 0)),
            ],
            out_specs=pl.BlockSpec((tm, cpad), lambda i: (i, 0)),
        ),
        compiler_params=pltpu.CompilerParams(
            dimension_semantics=("parallel",),
            vmem_limit_bytes=32 * 1024 * 1024),
        cost_estimate=pl.CostEstimate(
            flops=flops, transcendentals=0, bytes_accessed=bytes_accessed),
    )(patches, w1, b1, w2, b2)

    # Drop padded rows / lanes, back to NCHW f32.
    out = out[:m, :C].astype(jnp.float32).reshape(N, H, W, C)
    return jnp.transpose(out, (0, 3, 1, 2))


def init_params(key, c_rgb, c_mo, c_out):
    """Deterministic synthetic weights (no checkpoint load)."""
    k1, k2, k3 = jax.random.split(key, 3)
    s_rgb = 1.0 / (3 * 3 * c_rgb) ** 0.5
    s_mo = 1.0 / (3 * 3 * c_mo) ** 0.5
    s_fuse = 1.0 / c_out ** 0.5
    w_rgb = jax.random.normal(k1, (3, 3, c_rgb, c_out), jnp.float32) * s_rgb
    w_mo = jax.random.normal(k2, (3, 3, c_mo, c_out), jnp.float32) * s_mo
    w_fuse = jax.random.normal(k3, (c_out, c_out), jnp.float32) * s_fuse
    b_rgb = jnp.zeros((1, 1, c_out), jnp.float32)
    b_mo = jnp.zeros((1, 1, c_out), jnp.float32)
    b_fuse = jnp.zeros((1, 1, c_out), jnp.float32)
    return (w_rgb, b_rgb, w_mo, b_mo, w_fuse, b_fuse)


def _reference(input_rgb, input_mo, params):
    """Pure-JAX reference (lax.conv).  Matmul operands are rounded through bf16
    to mirror the kernel's deliberate bf16-operand / f32-accumulate choice."""
    w_rgb, b_rgb, w_mo, b_mo, w_fuse, b_fuse = params
    rnd = lambda a: a.astype(jnp.bfloat16).astype(jnp.float32)
    dn = jax.lax.conv_dimension_numbers(
        input_rgb.shape, (3, 3, 1, 1), ('NCHW', 'HWIO', 'NCHW'))

    def conv3(x, w, b):
        y = jax.lax.conv_general_dilated(
            rnd(x), rnd(w), (1, 1), 'SAME', dimension_numbers=dn,
            precision=jax.lax.Precision.HIGHEST)
        return jnp.maximum(y + b.reshape(1, -1, 1, 1), 0.0)

    f = conv3(input_rgb, w_rgb, b_rgb) + conv3(input_mo, w_mo, b_mo)
    y = jnp.einsum('nchw,cd->ndhw', rnd(f), rnd(w_fuse),
                   precision=jax.lax.Precision.HIGHEST) + b_fuse.reshape(1, -1, 1, 1)
    return jnp.maximum(y, 0.0)


if __name__ == "__main__":
    key = jax.random.PRNGKey(0)
    k_rgb, k_mo, k_w = jax.random.split(key, 3)

    N, C_RGB, C_MO, H, W, C = 2, 3, 5, 16, 16, 32
    input_rgb = jax.random.normal(k_rgb, (N, C_RGB, H, W), jnp.float32)
    input_mo = jax.random.normal(k_mo, (N, C_MO, H, W), jnp.float32)
    params = init_params(k_w, C_RGB, C_MO, C)

    out = amma_backbone_forward(input_rgb, input_mo, params)
    out = jax.block_until_ready(out)

    ref = _reference(input_rgb, input_mo, params)
    assert out.shape == (N, C, H, W), out.shape
    assert jnp.allclose(out, ref, atol=2e-2, rtol=2e-2), "mismatch vs reference"

    print("KERNEL_OK")
</pallas_src>

<mosaic_0001>
module attributes {stable_mosaic.version = 11 : i64} {
  func.func @_fused_stem_kernel(%arg0: i32, %arg1: memref<128x72xbf16, #tpu.memory_space<vmem>>, %arg2: memref<72x128xbf16, #tpu.memory_space<vmem>>, %arg3: memref<1x128xf32, #tpu.memory_space<vmem>>, %arg4: memref<64x128xbf16, #tpu.memory_space<vmem>>, %arg5: memref<1x128xf32, #tpu.memory_space<vmem>>, %arg6: memref<128x128xbf16, #tpu.memory_space<vmem>>) attributes {dimension_semantics = [#tpu.dimension_semantics<parallel>], iteration_bounds = array<i64: 4>, scalar_prefetch = 0 : i64, scratch_operands = 0 : i64, tpu.core_type = #tpu.core_type<tc>, window_params = [{transform_indices = @transform_0, window_bounds = array<i64: 128, 72>}, {pipeline_mode = #tpu.pipeline_mode<synchronous>, transform_indices = @transform_1, window_bounds = array<i64: 72, 128>}, {pipeline_mode = #tpu.pipeline_mode<synchronous>, transform_indices = @transform_2, window_bounds = array<i64: 1, 128>}, {pipeline_mode = #tpu.pipeline_mode<synchronous>, transform_indices = @transform_3, window_bounds = array<i64: 64, 128>}, {pipeline_mode = #tpu.pipeline_mode<synchronous>, transform_indices = @transform_4, window_bounds = array<i64: 1, 128>}, {transform_indices = @transform_5, window_bounds = array<i64: 128, 128>}]} {
    %c0 = arith.constant 0 : index
    %c0_0 = arith.constant 0 : index
    %0 = vector.load %arg1[%c0, %c0_0] : memref<128x72xbf16, #tpu.memory_space<vmem>>, vector<128x72xbf16>
    %c0_1 = arith.constant 0 : index
    %c0_2 = arith.constant 0 : index
    %1 = vector.load %arg2[%c0_1, %c0_2] : memref<72x128xbf16, #tpu.memory_space<vmem>>, vector<72x128xbf16>
    %cst = arith.constant dense<0.000000e+00> : vector<128x128xf32>
    %2 = tpu.matmul %0, %1, %cst {dimension_numbers = #tpu.dot_dimension_numbers<[1], [0], [0], [1], [0, 0, 1, 1], [], []>} : vector<128x72xbf16>, vector<72x128xbf16>, vector<128x128xf32> -> vector<128x128xf32>
    %c0_3 = arith.constant 0 : index
    %c0_4 = arith.constant 0 : index
    %3 = vector.load %arg3[%c0_3, %c0_4] : memref<1x128xf32, #tpu.memory_space<vmem>>, vector<1x128xf32>
    %4 = vector.broadcast %3 : vector<1x128xf32> to vector<128x128xf32>
    %5 = arith.addf %2, %4 : vector<128x128xf32>
    %cst_5 = arith.constant 0.000000e+00 : f32
    %6 = vector.broadcast %cst_5 : f32 to vector<128x128xf32>
    %7 = arith.maximumf %5, %6 : vector<128x128xf32>
    %8 = vector.extract_strided_slice %7 {offsets = [0, 0], sizes = [128, 64], strides = [1, 1]} : vector<128x128xf32> to vector<128x64xf32>
    %9 = vector.extract_strided_slice %7 {offsets = [0, 64], sizes = [128, 64], strides = [1, 1]} : vector<128x128xf32> to vector<128x64xf32>
    %10 = arith.addf %8, %9 : vector<128x64xf32>
    %11 = arith.truncf %10 : vector<128x64xf32> to vector<128x64xbf16>
    %c0_6 = arith.constant 0 : index
    %c0_7 = arith.constant 0 : index
    %12 = vector.load %arg4[%c0_6, %c0_7] : memref<64x128xbf16, #tpu.memory_space<vmem>>, vector<64x128xbf16>
    %cst_8 = arith.constant dense<0.000000e+00> : vector<128x128xf32>
    %13 = tpu.matmul %11, %12, %cst_8 {dimension_numbers = #tpu.dot_dimension_numbers<[1], [0], [0], [1], [0, 0, 1, 1], [], []>} : vector<128x64xbf16>, vector<64x128xbf16>, vector<128x128xf32> -> vector<128x128xf32>
    %c0_9 = arith.constant 0 : index
    %c0_10 = arith.constant 0 : index
    %14 = vector.load %arg5[%c0_9, %c0_10] : memref<1x128xf32, #tpu.memory_space<vmem>>, vector<1x128xf32>
    %15 = vector.broadcast %14 : vector<1x128xf32> to vector<128x128xf32>
    %16 = arith.addf %13, %15 : vector<128x128xf32>
    %cst_11 = arith.constant 0.000000e+00 : f32
    %17 = vector.broadcast %cst_11 : f32 to vector<128x128xf32>
    %18 = arith.maximumf %16, %17 : vector<128x128xf32>
    %19 = arith.truncf %18 : vector<128x128xf32> to vector<128x128xbf16>
    %c0_12 = arith.constant 0 : index
    %c0_13 = arith.constant 0 : index
    %20 = vector.load %arg6[%c0_12, %c0_13] : memref<128x128xbf16, #tpu.memory_space<vmem>>, vector<128x128xbf16>
    tpu.vector_store %arg6[%c0_12, %c0_13], %19 {strides = array<i32>} : memref<128x128xbf16, #tpu.memory_space<vmem>>, vector<128x128xbf16>,
    return
  }
  func.func @transform_0(%arg0: i32) -> (i32, i32) {
    %c0_i32 = arith.constant 0 : i32
    %c0_i32_0 = arith.constant 0 : i32
    return %arg0, %c0_i32 : i32, i32
  }
  func.func @transform_1(%arg0: i32) -> (i32, i32) {
    %c0_i32 = arith.constant 0 : i32
    %c0_i32_0 = arith.constant 0 : i32
    %c0_i32_1 = arith.constant 0 : i32
    return %c0_i32, %c0_i32_0 : i32, i32
  }
  func.func @transform_2(%arg0: i32) -> (i32, i32) {
    %c0_i32 = arith.constant 0 : i32
    %c0_i32_0 = arith.constant 0 : i32
    %c0_i32_1 = arith.constant 0 : i32
    return %c0_i32, %c0_i32_0 : i32, i32
  }
  func.func @transform_3(%arg0: i32) -> (i32, i32) {
    %c0_i32 = arith.constant 0 : i32
    %c0_i32_0 = arith.constant 0 : i32
    %c0_i32_1 = arith.constant 0 : i32
    return %c0_i32, %c0_i32_0 : i32, i32
  }
  func.func @transform_4(%arg0: i32) -> (i32, i32) {
    %c0_i32 = arith.constant 0 : i32
    %c0_i32_0 = arith.constant 0 : i32
    %c0_i32_1 = arith.constant 0 : i32
    return %c0_i32, %c0_i32_0 : i32, i32
  }
  func.func @transform_5(%arg0: i32) -> (i32, i32) {
    %c0_i32 = arith.constant 0 : i32
    %c0_i32_0 = arith.constant 0 : i32
    return %arg0, %c0_i32 : i32, i32
  }
}

</mosaic_0001>

<llo_original>
// kernel: amma_backbone_forward.1
$region0: #{amma_backbone_forward.1}
  #allocation0 [shape = 'u32[]', space=smem, size = 0x4, offset = 0x4, fixed_abs, tag = 'smem constant byte address 0x4 - core index']
  #allocation1 [shape = 'u32[144,128]{1,0:T(1,128)}', space=vmem, size = 0x12000, scoped, tag = 'internal scratch']
  %s0 = inlined_call_operand.vmem [shape: bf16[512,72], index: 0, kind: input, shape index: {}]
  %s1 = inlined_call_operand.vmem [shape: bf16[72,128], index: 1, kind: input, shape index: {}]
  %s2 = inlined_call_operand.vmem [shape: f32[1,128], index: 2, kind: input, shape index: {}]
  %s3 = inlined_call_operand.vmem [shape: bf16[64,128], index: 3, kind: input, shape index: {}]
  %s4 = inlined_call_operand.vmem [shape: f32[1,128], index: 4, kind: input, shape index: {}]
  %s5 = inlined_call_operand.vmem [shape: bf16[512,128], index: 5, kind: output, shape index: {}]
  %s6 = sld [smem:[#allocation0]]
  $region53: #{amma_backbone_forward.1} parent=0
    _
  %s8 = ssub.s32 1, %s6
  %s9 = scalar_select 0, %s8, %s6
  loop: start=0, step=1, limit=6
  $region2: #{amma_backbone_forward.1} parent=0 // loop_pre_header
    _
  $region3: #{amma_backbone_forward.1} parent=0 // loop_header
    %s11 = sphi 0, %s15
    %p12 = scmp.ge.s32.totalorder %s11, 6
    %s21 = sphi 0, %s23
    %s24 = sphi 0, %s21
    %s25 = sphi 0, %s24
    %s41 = sphi 0, %s25
    %s45 = sphi 0, %s45
    %s47 = sphi 0, %s45
    %s48 = sphi 0, %s47
    %s62 = sphi 0, %s48
    %s66 = sphi 0, %s66
    %s68 = sphi 0, %s66
    %s69 = sphi 0, %s68
    %s83 = sphi 0, %s69
    %s87 = sphi 0, %s87
    %s89 = sphi 0, %s87
    %s90 = sphi 0, %s89
    %s104 = sphi 0, %s90
    %s108 = sphi 0, %s108
    %s110 = sphi 0, %s108
    %s111 = sphi 0, %s110
    %s125 = sphi 0, %s111
    %s131 = sphi 0, %s133
    %s134 = sphi 0, %s131
    %s135 = sphi 0, %s134
    %s151 = sphi 0, %s135
  $region4: #{amma_backbone_forward.1} parent=0 // loop_header_branch
    %14 = sbr.rel (%p12) target = $region8
  $region5: #{amma_backbone_forward.1} parent=0 // loop_body
    %s16 = ssub.s32 %s11, 1
    %s17 = ssub.s32 %s11, 2
    %s18 = sadd.s32 %s11, 1
    %s19 = ssub.s32 %s11, %s18
    %p20 = scmp.eq.s32.totalorder %s19, 0
    %s22 = sadd.s32 %s21, 1
    %s23 = scalar_select %p20, %s21, %s22
    %p26 = pneg %p20
    %p27 = scmp.eq.s32.totalorder %s11, 3
    %p28 = por %p26, %p27
    %p29 = scmp.ne.s32.totalorder %s21, %s24
    %p30 = scmp.eq.s32.totalorder %s11, 0
    %p31 = por %p29, %p30
    %p32 = scmp.ne.s32.totalorder %s21, %s24
    %p33 = scmp.eq.s32.totalorder %s16, 3
    %p34 = por %p32, %p33
    %p35 = scmp.ne.s32.totalorder %s24, %s25
    %p36 = scmp.eq.s32.totalorder %s16, 0
    %p37 = por %p35, %p36
    %p38 = scmp.ne.s32.totalorder %s24, %s25
    %p39 = scmp.eq.s32.totalorder %s17, 3
    %p40 = por %p38, %p39
    %p42 = scmp.ne.s32.totalorder %s25, %s41
    %p43 = scmp.eq.s32.totalorder %s17, 0
    %p44 = por %p42, %p43
    %s46 = sadd.s32 %s45, 1
    %p49 = scmp.eq.s32.totalorder %s11, 3
    %p50 = scmp.ne.s32.totalorder %s45, %s47
    %p51 = scmp.eq.s32.totalorder %s11, 0
    %p52 = por %p50, %p51
    %p53 = scmp.ne.s32.totalorder %s45, %s47
    %p54 = scmp.eq.s32.totalorder %s16, 3
    %p55 = por %p53, %p54
    %p56 = scmp.ne.s32.totalorder %s47, %s48
    %p57 = scmp.eq.s32.totalorder %s16, 0
    %p58 = por %p56, %p57
    %p59 = scmp.ne.s32.totalorder %s47, %s48
    %p60 = scmp.eq.s32.totalorder %s17, 3
    %p61 = por %p59, %p60
    %p63 = scmp.ne.s32.totalorder %s48, %s62
    %p64 = scmp.eq.s32.totalorder %s17, 0
    %p65 = por %p63, %p64
    %s67 = sadd.s32 %s66, 1
    %p70 = scmp.eq.s32.totalorder %s11, 3
    %p71 = scmp.ne.s32.totalorder %s66, %s68
    %p72 = scmp.eq.s32.totalorder %s11, 0
    %p73 = por %p71, %p72
    %p74 = scmp.ne.s32.totalorder %s66, %s68
    %p75 = scmp.eq.s32.totalorder %s16, 3
    %p76 = por %p74, %p75
    %p77 = scmp.ne.s32.totalorder %s68, %s69
    %p78 = scmp.eq.s32.totalorder %s16, 0
    %p79 = por %p77, %p78
    %p80 = scmp.ne.s32.totalorder %s68, %s69
    %p81 = scmp.eq.s32.totalorder %s17, 3
    %p82 = por %p80, %p81
    %p84 = scmp.ne.s32.totalorder %s69, %s83
    %p85 = scmp.eq.s32.totalorder %s17, 0
    %p86 = por %p84, %p85
    %s88 = sadd.s32 %s87, 1
    %p91 = scmp.eq.s32.totalorder %s11, 3
    %p92 = scmp.ne.s32.totalorder %s87, %s89
    %p93 = scmp.eq.s32.totalorder %s11, 0
    %p94 = por %p92, %p93
    %p95 = scmp.ne.s32.totalorder %s87, %s89
    %p96 = scmp.eq.s32.totalorder %s16, 3
    %p97 = por %p95, %p96
    %p98 = scmp.ne.s32.totalorder %s89, %s90
    %p99 = scmp.eq.s32.totalorder %s16, 0
    %p100 = por %p98, %p99
    %p101 = scmp.ne.s32.totalorder %s89, %s90
    %p102 = scmp.eq.s32.totalorder %s17, 3
    %p103 = por %p101, %p102
    %p105 = scmp.ne.s32.totalorder %s90, %s104
    %p106 = scmp.eq.s32.totalorder %s17, 0
    %p107 = por %p105, %p106
    %s109 = sadd.s32 %s108, 1
    %p112 = scmp.eq.s32.totalorder %s11, 3
    %p113 = scmp.ne.s32.totalorder %s108, %s110
    %p114 = scmp.eq.s32.totalorder %s11, 0
    %p115 = por %p113, %p114
    %p116 = scmp.ne.s32.totalorder %s108, %s110
    %p117 = scmp.eq.s32.totalorder %s16, 3
    %p118 = por %p116, %p117
    %p119 = scmp.ne.s32.totalorder %s110, %s111
    %p120 = scmp.eq.s32.totalorder %s16, 0
    %p121 = por %p119, %p120
    %p122 = scmp.ne.s32.totalorder %s110, %s111
    %p123 = scmp.eq.s32.totalorder %s17, 3
    %p124 = por %p122, %p123
    %p126 = scmp.ne.s32.totalorder %s111, %s125
    %p127 = scmp.eq.s32.totalorder %s17, 0
    %p128 = por %p126, %p127
    %s129 = ssub.s32 %s11, %s18
    %p130 = scmp.eq.s32.totalorder %s129, 0
    %s132 = sadd.s32 %s131, 1
    %s133 = scalar_select %p130, %s131, %s132
    %p136 = pneg %p130
    %p137 = scmp.eq.s32.totalorder %s11, 3
    %p138 = por %p136, %p137
    %p139 = scmp.ne.s32.totalorder %s131, %s134
    %p140 = scmp.eq.s32.totalorder %s11, 0
    %p141 = por %p139, %p140
    %p142 = scmp.ne.s32.totalorder %s131, %s134
    %p143 = scmp.eq.s32.totalorder %s16, 3
    %p144 = por %p142, %p143
    %p145 = scmp.ne.s32.totalorder %s134, %s135
    %p146 = scmp.eq.s32.totalorder %s16, 0
    %p147 = por %p145, %p146
    %p148 = scmp.ne.s32.totalorder %s134, %s135
    %p149 = scmp.eq.s32.totalorder %s17, 3
    %p150 = por %p148, %p149
    %p152 = scmp.ne.s32.totalorder %s135, %s151
    %p153 = scmp.eq.s32.totalorder %s17, 0
    %p154 = por %p152, %p153
    %p155 = scmp.le.s32.totalorder 1, %s11
    %p156 = scmp.lt.s32.totalorder %s11, 5
    %p157 = pnand %p155, %p156
    %p158 = pneg %p157
    // Predicated region
    $region9: #{amma_backbone_forward.1} parent=5 // pred_check
      _
    $region10: #{amma_backbone_forward.1} parent=5 // pred_check_branch
      %160 = sbr.rel (%p157) target = $region12
    $region11: #{amma_backbone_forward.1} parent=5 // pred_region
      %s161 = ssub.s32 %s11, 1
      // Predicated region
      $region13: #{amma_backbone_forward.1} parent=11 // pred_check
        %p162 = pneg %p58
      $region14: #{amma_backbone_forward.1} parent=11 // pred_check_branch
        %164 = sbr.rel (%p162) target = $region16
      $region15: #{amma_backbone_forward.1} parent=11 // pred_region
        _
      $region16: #{amma_backbone_forward.1} parent=11 // pred_fallthru
        _
      // Predicated region
      $region17: #{amma_backbone_forward.1} parent=11 // pred_check
        %p165 = pneg %p79
      $region18: #{amma_backbone_forward.1} parent=11 // pred_check_branch
        %167 = sbr.rel (%p165) target = $region20
      $region19: #{amma_backbone_forward.1} parent=11 // pred_region
        _
      $region20: #{amma_backbone_forward.1} parent=11 // pred_fallthru
        _
      // Predicated region
      $region21: #{amma_backbone_forward.1} parent=11 // pred_check
        %p168 = pneg %p100
      $region22: #{amma_backbone_forward.1} parent=11 // pred_check_branch
        %170 = sbr.rel (%p168) target = $region24
      $region23: #{amma_backbone_forward.1} parent=11 // pred_region
        _
      $region24: #{amma_backbone_forward.1} parent=11 // pred_fallthru
        _
      // Predicated region
      $region25: #{amma_backbone_forward.1} parent=11 // pred_check
        %p171 = pneg %p121
      $region26: #{amma_backbone_forward.1} parent=11 // pred_check_branch
        %173 = sbr.rel (%p171) target = $region28
      $region27: #{amma_backbone_forward.1} parent=11 // pred_region
        _
      $region28: #{amma_backbone_forward.1} parent=11 // pred_fallthru
        _
    $region12: #{amma_backbone_forward.1} parent=5 // pred_fallthru
      _
    %p174 = scmp.lt.s32.totalorder %s11, 4
    // Predicated region
    $region29: #{amma_backbone_forward.1} parent=5 // pred_check
      %p175 = pneg %p174
    $region30: #{amma_backbone_forward.1} parent=5 // pred_check_branch
      %177 = sbr.rel (%p175) target = $region32
    $region31: #{amma_backbone_forward.1} parent=5 // pred_region
      // Predicated region
      $region33: #{amma_backbone_forward.1} parent=31 // pred_check
        %p178 = pneg %p31
      $region34: #{amma_backbone_forward.1} parent=31 // pred_check_branch
        %180 = sbr.rel (%p178) target = $region36
      $region35: #{amma_backbone_forward.1} parent=31 // pred_region
        %s181 = smul.u32 16, %s11
        %p182 = scmp.lt.s32.totalorder %s181, 63
        %s183 = scalar_select %p182, %s181, 63
        %s184 = smul.addr %s183, 4
        %s185 = scalar_lea.vmem %s0, %s184
        %s186 = smul.u32 16, %s11
      $region36: #{amma_backbone_forward.1} parent=31 // pred_fallthru
        _
    $region32: #{amma_backbone_forward.1} parent=5 // pred_fallthru
      _
    %p187 = scmp.le.s32.totalorder 1, %s11
    %p188 = scmp.lt.s32.totalorder %s11, 5
    %p189 = pnand %p187, %p188
    %p190 = pneg %p189
    // Predicated region
    $region37: #{amma_backbone_forward.1} parent=5 // pred_check
      _
    $region38: #{amma_backbone_forward.1} parent=5 // pred_check_branch
      %192 = sbr.rel (%p189) target = $region40
    $region39: #{amma_backbone_forward.1} parent=5 // pred_region
      %s193 = ssub.s32 %s11, 1
      %s194 = smul.u32 16, %s16
      %p195 = scmp.lt.s32.totalorder %s194, 63
      %s196 = scalar_select %p195, %s194, 63
      %s197 = smul.addr %s196, 4
      %s198 = scalar_lea.vmem %s0, %s197
      %p199 = pneg %p37
      %p200 = pneg %p34
      %p201 = pneg %p58
      %p202 = pneg %p55
      %p203 = pneg %p79
      %p204 = pneg %p76
      %p205 = pneg %p100
      %p206 = pneg %p97
      %p207 = pneg %p121
      %p208 = pneg %p118
      %p209 = pneg %p147
      %p210 = pneg %p144
      %s211 = smul.u32 16, %s16
      %p212 = scmp.lt.s32.totalorder %s211, 63
      %s213 = scalar_select %p212, %s211, 63
      %s214 = smul.addr %s213, 4
      %s215 = scalar_lea.vmem %s5, %s214
      %s216 = smul.u32 16, %s16
      %p217 = scmp.lt.s32.totalorder %s216, 63
      %s218 = scalar_select %p217, %s216, 63
      %s219 = smul.addr %s218, 4
      %s220 = scalar_lea.vmem %s0, %s219
      %s221 = smul.u32 16, %s16
      %s222 = smul.u32 16, %s16
      %p223 = scmp.lt.s32.totalorder %s222, 63
      %s224 = scalar_select %p223, %s222, 63
      %s225 = smul.addr %s224, 4
      %s226 = scalar_lea.vmem %s5, %s225
      %s227 = smul.u32 16, %s16
      %v229 = vld [vmem:[%s220] sm:$0xf]
      %v230 = vld [vmem:[%s220 + $0x4] sm:$0xf]
      %v231 = vld [vmem:[%s220 + $0x8] sm:$0xf]
      %v232 = vld [vmem:[%s220 + $0xc] sm:$0xf]
      %v233 = vld [vmem:[%s220 + $0x10] sm:$0xf]
      %v234 = vld [vmem:[%s220 + $0x14] sm:$0xf]
      %v235 = vld [vmem:[%s220 + $0x18] sm:$0xf]
      %v236 = vld [vmem:[%s220 + $0x1c] sm:$0xf]
      %v237 = vld [vmem:[%s220 + $0x20] sm:$0xf]
      %v238 = vld [vmem:[%s220 + $0x24] sm:$0xf]
      %v239 = vld [vmem:[%s220 + $0x28] sm:$0xf]
      %v240 = vld [vmem:[%s220 + $0x2c] sm:$0xf]
      %v241 = vld [vmem:[%s220 + $0x30] sm:$0xf]
      %v242 = vld [vmem:[%s220 + $0x34] sm:$0xf]
      %v243 = vld [vmem:[%s220 + $0x38] sm:$0xf]
      %v244 = vld [vmem:[%s220 + $0x3c] sm:$0xf]
      %v245 = vld [vmem:[%s1] sm:$0xf]
      %v246 = vld [vmem:[%s1 + $0x4] sm:$0xf]
      %v247 = vld [vmem:[%s1 + $0x8] sm:$0xf]
      %v248 = vld [vmem:[%s1 + $0xc] sm:$0xf]
      %v249 = vld [vmem:[%s1 + $0x10] sm:$0xf]
      %v250 = vld [vmem:[%s1 + $0x14] sm:$0xf]
      %v251 = vld [vmem:[%s1 + $0x18] sm:$0xf]
      %v252 = vld [vmem:[%s1 + $0x1c] sm:$0xf]
      %v253 = vld [vmem:[%s1 + $0x20] sm:$0xf]
      %v254 = vld [vmem:[%s2] sm:$0x1]
      %v256 = vlaneseq
      %v257 = vshrl.u32 %v256, 7
      %v258 = vsub.s32 0, %v257
      %v259 = vrot.slane %v254, %v258
      %v277 = vunpack.c.l.b16 %v229
      %v278 = vunpack.c.l.b16 %v230
      %v279 = vunpack.c.l.b16 %v231
      %v280 = vunpack.c.l.b16 %v232
      %v281 = vunpack.c.l.b16 %v233
      %v282 = vunpack.c.l.b16 %v234
      %v283 = vunpack.c.l.b16 %v235
      %v284 = vunpack.c.l.b16 %v236
      %v285 = vunpack.c.l.b16 %v237
      %v286 = vunpack.c.l.b16 %v238
      %v287 = vunpack.c.l.b16 %v239
      %v288 = vunpack.c.l.b16 %v240
      %v289 = vunpack.c.l.b16 %v241
      %v290 = vunpack.c.l.b16 %v242
      %v291 = vunpack.c.l.b16 %v243
      %v292 = vunpack.c.l.b16 %v244
      %v293 = vpack.c.b16 %v278, %v277
      %v294 = vpack.c.b16 %v280, %v279
      %v295 = vpack.c.b16 %v282, %v281
      %v296 = vpack.c.b16 %v284, %v283
      %v297 = vpack.c.b16 %v286, %v285
      %v298 = vpack.c.b16 %v288, %v287
      %v299 = vpack.c.b16 %v290, %v289
      %v300 = vpack.c.b16 %v292, %v291
      %v310 = vunpack.c.l.b16 %v245
      %v311 = vunpack.c.l.b16 %v246
      %v312 = vunpack.c.l.b16 %v247
      %v313 = vunpack.c.l.b16 %v248
      %v314 = vunpack.c.l.b16 %v249
      %v315 = vunpack.c.l.b16 %v250
      %v316 = vunpack.c.l.b16 %v251
      %v317 = vunpack.c.l.b16 %v252
      %v318 = vunpack.c.l.b16 %v253
      %v319 = vpack.c.b16 %v311, %v310
      %v320 = vpack.c.b16 %v313, %v312
      %v321 = vpack.c.b16 %v315, %v314
      %v322 = vpack.c.b16 %v317, %v316
      %v323 = vpack.c.b16 %v318, %v318
      %vm328 = vcmask 588800
      %v330 = vsel %vm328, %v293, 0
      %v333 = vsel %vm328, %v294, 0
      %v336 = vsel %vm328, %v295, 0
      %v339 = vsel %vm328, %v296, 0
      %v342 = vsel %vm328, %v297, 0
      %v345 = vsel %vm328, %v298, 0
      %v348 = vsel %vm328, %v299, 0
      %v351 = vsel %vm328, %v300, 0
      %vm353 = vcmask 1043456
      %v355 = vsel %vm353, %v323, 0
      %357 = vmatprep.subr.bf16.mxu0 0
      %358 = vmatpush1.bf16.msra.mxu0 %v319
      %359 = vmatprep.subr.bf16.mxu0 0
      %360 = vmatpush1.bf16.msra.mxu0 %v320
      %361 = vmatprep.subr.bf16.mxu0 0
      %362 = vmatpush1.bf16.msra.mxu0 %v321
      %363 = vmatprep.subr.bf16.mxu0 0
      %364 = vmatpush1.bf16.msra.mxu0 %v322
      %365 = vmatprep.subr.bf16.mxu0 0
      %366 = vmatpush1.bf16.msra.mxu0 %v355
      %367 = vmatprep.subr.bf16.mxu0 0
      %368 = vmatpush1.bf16.msra.mxu0 0
      %369 = vmatprep.subr.bf16.mxu0 0
      %370 = vmatpush1.bf16.msra.mxu0 0
      %371 = vmatprep.subr.bf16.mxu0 0
      %372 = vmatpush1.bf16.msra.mxu0 0
      %373 = vmatprep.subr.bf16.mxu0 0
      %374 = vmatpush1.bf16.msra.mxu0 0
      %375 = vmatprep.subr.bf16.mxu0 0
      %376 = vmatpush1.bf16.msra.mxu0 0
      %377 = vmatprep.subr.bf16.mxu0 0
      %378 = vmatpush1.bf16.msra.mxu0 0
      %379 = vmatprep.subr.bf16.mxu0 0
      %380 = vmatpush1.bf16.msra.mxu0 0
      %381 = vmatprep.subr.bf16.mxu0 0
      %382 = vmatpush1.bf16.msra.mxu0 0
      %383 = vmatprep.subr.bf16.mxu0 0
      %384 = vmatpush1.bf16.msra.mxu0 0
      %385 = vmatprep.subr.bf16.mxu0 0
      %386 = vmatpush1.bf16.msra.mxu0 0
      %387 = vmatprep.subr.bf16.mxu0 0
      %388 = vmatpush1.bf16.msra.mxu0 0
      %389 = vmatprep.mubr.bf16.mxu0 0
      %390 = vmatmul.mubr.bf16.gmra.mrb[0].mxu0 %v330
      %v391 = vpop.f32.mrb[0].mxu0
      %v392 = vadd.f32 %v259, %v391
      %v393 = vpop.f32.mrb[0].mxu0
      %v394 = vpop.f32.mrb[0].mxu0
      %v395 = vadd.f32 %v259, %v394
      %v396 = vpop.f32.mrb[0].mxu0
      %397 = vmatprep.mubr.bf16.mxu0 0
      %398 = vmatmul.mubr.bf16.gmra.mrb[0].mxu0 %v333
      %v399 = vpop.f32.mrb[0].mxu0
      %v400 = vadd.f32 %v259, %v399
      %v401 = vpop.f32.mrb[0].mxu0
      %v402 = vpop.f32.mrb[0].mxu0
      %v403 = vadd.f32 %v259, %v402
      %v404 = vpop.f32.mrb[0].mxu0
      %405 = vmatprep.mubr.bf16.mxu0 0
      %406 = vmatmul.mubr.bf16.gmra.mrb[0].mxu0 %v336
      %v407 = vpop.f32.mrb[0].mxu0
      %v408 = vadd.f32 %v259, %v407
      %v409 = vpop.f32.mrb[0].mxu0
      %v410 = vpop.f32.mrb[0].mxu0
      %v411 = vadd.f32 %v259, %v410
      %v412 = vpop.f32.mrb[0].mxu0
      %413 = vmatprep.mubr.bf16.mxu0 0
      %414 = vmatmul.mubr.bf16.gmra.mrb[0].mxu0 %v339
      %v415 = vpop.f32.mrb[0].mxu0
      %v416 = vadd.f32 %v259, %v415
      %v417 = vpop.f32.mrb[0].mxu0
      %v418 = vpop.f32.mrb[0].mxu0
      %v419 = vadd.f32 %v259, %v418
      %v420 = vpop.f32.mrb[0].mxu0
      %421 = vmatprep.mubr.bf16.mxu0 0
      %422 = vmatmul.mubr.bf16.gmra.mrb[0].mxu0 %v342
      %v423 = vpop.f32.mrb[0].mxu0
      %v424 = vadd.f32 %v259, %v423
      %v425 = vpop.f32.mrb[0].mxu0
      %v426 = vpop.f32.mrb[0].mxu0
      %v427 = vadd.f32 %v259, %v426
      %v428 = vpop.f32.mrb[0].mxu0
      %429 = vmatprep.mubr.bf16.mxu0 0
      %430 = vmatmul.mubr.bf16.gmra.mrb[0].mxu0 %v345
      %v431 = vpop.f32.mrb[0].mxu0
      %v432 = vadd.f32 %v259, %v431
      %v433 = vpop.f32.mrb[0].mxu0
      %v434 = vpop.f32.mrb[0].mxu0
      %v435 = vadd.f32 %v259, %v434
      %v436 = vpop.f32.mrb[0].mxu0
      %437 = vmatprep.mubr.bf16.mxu0 0
      %438 = vmatmul.mubr.bf16.gmra.mrb[0].mxu0 %v348
      %v439 = vpop.f32.mrb[0].mxu0
      %v440 = vadd.f32 %v259, %v439
      %v441 = vpop.f32.mrb[0].mxu0
      %v442 = vpop.f32.mrb[0].mxu0
      %v443 = vadd.f32 %v259, %v442
      %v444 = vpop.f32.mrb[0].mxu0
      %445 = vmatprep.mubr.bf16.mxu0 0
      %446 = vmatmul.mubr.bf16.gmra.mrb[0].mxu0 %v351
      %v447 = vpop.f32.mrb[0].mxu0
      %v448 = vadd.f32 %v259, %v447
      %v449 = vpop.f32.mrb[0].mxu0
      %v450 = vpop.f32.mrb[0].mxu0
      %v451 = vadd.f32 %v259, %v450
      %v452 = vpop.f32.mrb[0].mxu0
      %453 = vdwg.mxu0
      %v454 = vmax.f32 %v392, 0.0
      %v455 = vmax.f32 %v395, 0.0
      %v456 = vmax.f32 %v400, 0.0
      %v457 = vmax.f32 %v403, 0.0
      %v458 = vmax.f32 %v408, 0.0
      %v459 = vmax.f32 %v411, 0.0
      %v460 = vmax.f32 %v416, 0.0
      %v461 = vmax.f32 %v419, 0.0
      %v462 = vmax.f32 %v424, 0.0
      %v463 = vmax.f32 %v427, 0.0
      %v464 = vmax.f32 %v432, 0.0
      %v465 = vmax.f32 %v435, 0.0
      %v466 = vmax.f32 %v440, 0.0
      %v467 = vmax.f32 %v443, 0.0
      %v468 = vmax.f32 %v448, 0.0
      %v469 = vmax.f32 %v451, 0.0
      %486 = vrot.lane.b32.xlu0 %v454, 64
      %v487 = vpop.permute.xlu0 %486
      %488 = vrot.lane.b32.xlu0 %v455, 64
      %v489 = vpop.permute.xlu0 %488
      %490 = vrot.lane.b32.xlu0 %v456, 64
      %v491 = vpop.permute.xlu0 %490
      %492 = vrot.lane.b32.xlu0 %v457, 64
      %v493 = vpop.permute.xlu0 %492
      %494 = vrot.lane.b32.xlu0 %v458, 64
      %v495 = vpop.permute.xlu0 %494
      %496 = vrot.lane.b32.xlu0 %v459, 64
      %v497 = vpop.permute.xlu0 %496
      %498 = vrot.lane.b32.xlu0 %v460, 64
      %v499 = vpop.permute.xlu0 %498
      %500 = vrot.lane.b32.xlu0 %v461, 64
      %v501 = vpop.permute.xlu0 %500
      %502 = vrot.lane.b32.xlu0 %v462, 64
      %v503 = vpop.permute.xlu0 %502
      %504 = vrot.lane.b32.xlu0 %v463, 64
      %v505 = vpop.permute.xlu0 %504
      %506 = vrot.lane.b32.xlu0 %v464, 64
      %v507 = vpop.permute.xlu0 %506
      %508 = vrot.lane.b32.xlu0 %v465, 64
      %v509 = vpop.permute.xlu0 %508
      %510 = vrot.lane.b32.xlu0 %v466, 64
      %v511 = vpop.permute.xlu0 %510
      %512 = vrot.lane.b32.xlu0 %v467, 64
      %v513 = vpop.permute.xlu0 %512
      %514 = vrot.lane.b32.xlu0 %v468, 64
      %v515 = vpop.permute.xlu0 %514
      %516 = vrot.lane.b32.xlu0 %v469, 64
      %v517 = vpop.permute.xlu0 %516
      %v534 = vadd.f32 %v454, %v487
      %v535 = vadd.f32 %v455, %v489
      %v536 = vadd.f32 %v456, %v491
      %v537 = vadd.f32 %v457, %v493
      %v538 = vadd.f32 %v458, %v495
      %v539 = vadd.f32 %v459, %v497
      %v540 = vadd.f32 %v460, %v499
      %v541 = vadd.f32 %v461, %v501
      %v542 = vadd.f32 %v462, %v503
      %v543 = vadd.f32 %v463, %v505
      %v544 = vadd.f32 %v464, %v507
      %v545 = vadd.f32 %v465, %v509
      %v546 = vadd.f32 %v466, %v511
      %v547 = vadd.f32 %v467, %v513
      %v548 = vadd.f32 %v468, %v515
      %v549 = vadd.f32 %v469, %v517
      %v550 = vpack.c.bf16 %v535, %v534
      %v551 = vpack.c.bf16 %v537, %v536
      %v552 = vpack.c.bf16 %v539, %v538
      %v553 = vpack.c.bf16 %v541, %v540
      %v554 = vpack.c.bf16 %v543, %v542
      %v555 = vpack.c.bf16 %v545, %v544
      %v556 = vpack.c.bf16 %v547, %v546
      %v557 = vpack.c.bf16 %v549, %v548
      %v558 = vld [vmem:[%s3] sm:$0xf]
      %v559 = vld [vmem:[%s3 + $0x4] sm:$0xf]
      %v560 = vld [vmem:[%s3 + $0x8] sm:$0xf]
      %v561 = vld [vmem:[%s3 + $0xc] sm:$0xf]
      %v562 = vld [vmem:[%s3 + $0x10] sm:$0xf]
      %v563 = vld [vmem:[%s3 + $0x14] sm:$0xf]
      %v564 = vld [vmem:[%s3 + $0x18] sm:$0xf]
      %v565 = vld [vmem:[%s3 + $0x1c] sm:$0xf]
      %v566 = vld [vmem:[%s4] sm:$0x1]
      %v568 = vlaneseq
      %v569 = vshrl.u32 %v568, 7
      %v570 = vsub.s32 0, %v569
      %v571 = vrot.slane %v566, %v570
      %v581 = vunpack.c.l.b16 %v558
      %v582 = vunpack.c.l.b16 %v559
      %v583 = vunpack.c.l.b16 %v560
      %v584 = vunpack.c.l.b16 %v561
      %v585 = vunpack.c.l.b16 %v562
      %v586 = vunpack.c.l.b16 %v563
      %v587 = vunpack.c.l.b16 %v564
      %v588 = vunpack.c.l.b16 %v565
      %v589 = vpack.c.b16 %v582, %v581
      %v590 = vpack.c.b16 %v584, %v583
      %v591 = vpack.c.b16 %v586, %v585
      %v592 = vpack.c.b16 %v588, %v587
      %vm597 = vcmask 523264
      %v599 = vsel %vm597, %v550, 0
      %v602 = vsel %vm597, %v551, 0
      %v605 = vsel %vm597, %v552, 0
      %v608 = vsel %vm597, %v553, 0
      %v611 = vsel %vm597, %v554, 0
      %v614 = vsel %vm597, %v555, 0
      %v617 = vsel %vm597, %v556, 0
      %v620 = vsel %vm597, %v557, 0
      %622 = vmatprep.subr.bf16.mxu0 0
      %623 = vmatpush1.bf16.msra.mxu0 %v589
      %624 = vmatprep.subr.bf16.mxu0 0
      %625 = vmatpush1.bf16.msra.mxu0 %v590
      %626 = vmatprep.subr.bf16.mxu0 0
      %627 = vmatpush1.bf16.msra.mxu0 %v591
      %628 = vmatprep.subr.bf16.mxu0 0
      %629 = vmatpush1.bf16.msra.mxu0 %v592
      %630 = vmatprep.subr.bf16.mxu0 0
      %631 = vmatpush1.bf16.msra.mxu0 0
      %632 = vmatprep.subr.bf16.mxu0 0
      %633 = vmatpush1.bf16.msra.mxu0 0
      %634 = vmatprep.subr.bf16.mxu0 0
      %635 = vmatpush1.bf16.msra.mxu0 0
      %636 = vmatprep.subr.bf16.mxu0 0
      %637 = vmatpush1.bf16.msra.mxu0 0
      %638 = vmatprep.subr.bf16.mxu0 0
      %639 = vmatpush1.bf16.msra.mxu0 0
      %640 = vmatprep.subr.bf16.mxu0 0
      %641 = vmatpush1.bf16.msra.mxu0 0
      %642 = vmatprep.subr.bf16.mxu0 0
      %643 = vmatpush1.bf16.msra.mxu0 0
      %644 = vmatprep.subr.bf16.mxu0 0
      %645 = vmatpush1.bf16.msra.mxu0 0
      %646 = vmatprep.subr.bf16.mxu0 0
      %647 = vmatpush1.bf16.msra.mxu0 0
      %648 = vmatprep.subr.bf16.mxu0 0
      %649 = vmatpush1.bf16.msra.mxu0 0
      %650 = vmatprep.subr.bf16.mxu0 0
      %651 = vmatpush1.bf16.msra.mxu0 0
      %652 = vmatprep.subr.bf16.mxu0 0
      %653 = vmatpush1.bf16.msra.mxu0 0
      %654 = vmatprep.mubr.bf16.mxu0 0
      %655 = vmatmul.mubr.bf16.gmra.mrb[0].mxu0 %v599
      %v656 = vpop.f32.mrb[0].mxu0
      %v657 = vadd.f32 %v571, %v656
      %v658 = vpop.f32.mrb[0].mxu0
      %v659 = vpop.f32.mrb[0].mxu0
      %v660 = vadd.f32 %v571, %v659
      %v661 = vpop.f32.mrb[0].mxu0
      %662 = vmatprep.mubr.bf16.mxu0 0
      %663 = vmatmul.mubr.bf16.gmra.mrb[0].mxu0 %v602
      %v664 = vpop.f32.mrb[0].mxu0
      %v665 = vadd.f32 %v571, %v664
      %v666 = vpop.f32.mrb[0].mxu0
      %v667 = vpop.f32.mrb[0].mxu0
      %v668 = vadd.f32 %v571, %v667
      %v669 = vpop.f32.mrb[0].mxu0
      %670 = vmatprep.mubr.bf16.mxu0 0
      %671 = vmatmul.mubr.bf16.gmra.mrb[0].mxu0 %v605
      %v672 = vpop.f32.mrb[0].mxu0
      %v673 = vadd.f32 %v571, %v672
      %v674 = vpop.f32.mrb[0].mxu0
      %v675 = vpop.f32.mrb[0].mxu0
      %v676 = vadd.f32 %v571, %v675
      %v677 = vpop.f32.mrb[0].mxu0
      %678 = vmatprep.mubr.bf16.mxu0 0
      %679 = vmatmul.mubr.bf16.gmra.mrb[0].mxu0 %v608
      %v680 = vpop.f32.mrb[0].mxu0
      %v681 = vadd.f32 %v571, %v680
      %v682 = vpop.f32.mrb[0].mxu0
      %v683 = vpop.f32.mrb[0].mxu0
      %v684 = vadd.f32 %v571, %v683
      %v685 = vpop.f32.mrb[0].mxu0
      %686 = vmatprep.mubr.bf16.mxu0 0
      %687 = vmatmul.mubr.bf16.gmra.mrb[0].mxu0 %v611
      %v688 = vpop.f32.mrb[0].mxu0
      %v689 = vadd.f32 %v571, %v688
      %v690 = vpop.f32.mrb[0].mxu0
      %v691 = vpop.f32.mrb[0].mxu0
      %v692 = vadd.f32 %v571, %v691
      %v693 = vpop.f32.mrb[0].mxu0
      %694 = vmatprep.mubr.bf16.mxu0 0
      %695 = vmatmul.mubr.bf16.gmra.mrb[0].mxu0 %v614
      %v696 = vpop.f32.mrb[0].mxu0
      %v697 = vadd.f32 %v571, %v696
      %v698 = vpop.f32.mrb[0].mxu0
      %v699 = vpop.f32.mrb[0].mxu0
      %v700 = vadd.f32 %v571, %v699
      %v701 = vpop.f32.mrb[0].mxu0
      %702 = vmatprep.mubr.bf16.mxu0 0
      %703 = vmatmul.mubr.bf16.gmra.mrb[0].mxu0 %v617
      %v704 = vpop.f32.mrb[0].mxu0
      %v705 = vadd.f32 %v571, %v704
      %v706 = vpop.f32.mrb[0].mxu0
      %v707 = vpop.f32.mrb[0].mxu0
      %v708 = vadd.f32 %v571, %v707
      %v709 = vpop.f32.mrb[0].mxu0
      %710 = vmatprep.mubr.bf16.mxu0 0
      %711 = vmatmul.mubr.bf16.gmra.mrb[0].mxu0 %v620
      %v712 = vpop.f32.mrb[0].mxu0
      %v713 = vadd.f32 %v571, %v712
      %v714 = vpop.f32.mrb[0].mxu0
      %v715 = vpop.f32.mrb[0].mxu0
      %v716 = vadd.f32 %v571, %v715
      %v717 = vpop.f32.mrb[0].mxu0
      %718 = vdwg.mxu0
      %v719 = vmax.f32 %v657, 0.0
      %v720 = vmax.f32 %v660, 0.0
      %v721 = vmax.f32 %v665, 0.0
      %v722 = vmax.f32 %v668, 0.0
      %v723 = vmax.f32 %v673, 0.0
      %v724 = vmax.f32 %v676, 0.0
      %v725 = vmax.f32 %v681, 0.0
      %v726 = vmax.f32 %v684, 0.0
      %v727 = vmax.f32 %v689, 0.0
      %v728 = vmax.f32 %v692, 0.0
      %v729 = vmax.f32 %v697, 0.0
      %v730 = vmax.f32 %v700, 0.0
      %v731 = vmax.f32 %v705, 0.0
      %v732 = vmax.f32 %v708, 0.0
      %v733 = vmax.f32 %v713, 0.0
      %v734 = vmax.f32 %v716, 0.0
      %v735 = vpack.c.bf16 %v720, %v719
      %v736 = vpack.c.bf16 %v722, %v721
      %v737 = vpack.c.bf16 %v724, %v723
      %v738 = vpack.c.bf16 %v726, %v725
      %v739 = vpack.c.bf16 %v728, %v727
      %v740 = vpack.c.bf16 %v730, %v729
      %v741 = vpack.c.bf16 %v732, %v731
      %v742 = vpack.c.bf16 %v734, %v733
      %v751 = vunpack.c.l.b16 %v735
      %v752 = vunpack.c.h.b16 %v735
      %v753 = vunpack.c.l.b16 %v736
      %v754 = vunpack.c.h.b16 %v736
      %v755 = vunpack.c.l.b16 %v737
      %v756 = vunpack.c.h.b16 %v737
      %v757 = vunpack.c.l.b16 %v738
      %v758 = vunpack.c.h.b16 %v738
      %v759 = vunpack.c.l.b16 %v739
      %v760 = vunpack.c.h.b16 %v739
      %v761 = vunpack.c.l.b16 %v740
      %v762 = vunpack.c.h.b16 %v740
      %v763 = vunpack.c.l.b16 %v741
      %v764 = vunpack.c.h.b16 %v741
      %v765 = vunpack.c.l.b16 %v742
      %v766 = vunpack.c.h.b16 %v742
      %v767 = vpack.c.b16 %v751, %v751
      %v768 = vpack.c.b16 %v752, %v752
      %v769 = vpack.c.b16 %v753, %v753
      %v770 = vpack.c.b16 %v754, %v754
      %v771 = vpack.c.b16 %v755, %v755
      %v772 = vpack.c.b16 %v756, %v756
      %v773 = vpack.c.b16 %v757, %v757
      %v774 = vpack.c.b16 %v758, %v758
      %v775 = vpack.c.b16 %v759, %v759
      %v776 = vpack.c.b16 %v760, %v760
      %v777 = vpack.c.b16 %v761, %v761
      %v778 = vpack.c.b16 %v762, %v762
      %v779 = vpack.c.b16 %v763, %v763
      %v780 = vpack.c.b16 %v764, %v764
      %v781 = vpack.c.b16 %v765, %v765
      %v782 = vpack.c.b16 %v766, %v766
      %799 = vst [vmem:[%s226] sm:$0xf] %v767
      %800 = vst [vmem:[%s226 + $0x4] sm:$0xf] %v768
      %801 = vst [vmem:[%s226 + $0x8] sm:$0xf] %v769
      %802 = vst [vmem:[%s226 + $0xc] sm:$0xf] %v770
      %803 = vst [vmem:[%s226 + $0x10] sm:$0xf] %v771
      %804 = vst [vmem:[%s226 + $0x14] sm:$0xf] %v772
      %805 = vst [vmem:[%s226 + $0x18] sm:$0xf] %v773
      %806 = vst [vmem:[%s226 + $0x1c] sm:$0xf] %v774
      %807 = vst [vmem:[%s226 + $0x20] sm:$0xf] %v775
      %808 = vst [vmem:[%s226 + $0x24] sm:$0xf] %v776
      %809 = vst [vmem:[%s226 + $0x28] sm:$0xf] %v777
      %810 = vst [vmem:[%s226 + $0x2c] sm:$0xf] %v778
      %811 = vst [vmem:[%s226 + $0x30] sm:$0xf] %v779
      %812 = vst [vmem:[%s226 + $0x34] sm:$0xf] %v780
      %813 = vst [vmem:[%s226 + $0x38] sm:$0xf] %v781
      %814 = vst [vmem:[%s226 + $0x3c] sm:$0xf] %v782
      %s815 = smul.u32 16, %s16
      %p816 = scmp.lt.s32.totalorder %s815, 63
      %s817 = scalar_select %p816, %s815, 63
      %s818 = smul.addr %s817, 4
      %s819 = scalar_lea.vmem %s5, %s818
      // Predicated region
      $region41: #{amma_backbone_forward.1} parent=39 // pred_check
        %p820 = pneg %p144
      $region42: #{amma_backbone_forward.1} parent=39 // pred_check_branch
        %822 = sbr.rel (%p820) target = $region44
      $region43: #{amma_backbone_forward.1} parent=39 // pred_region
        %s823 = smul.u32 16, %s16
      $region44: #{amma_backbone_forward.1} parent=39 // pred_fallthru
        _
    $region40: #{amma_backbone_forward.1} parent=5 // pred_fallthru
      _
    %p824 = scmp.le.s32.totalorder 2, %s11
    // Predicated region
    $region45: #{amma_backbone_forward.1} parent=5 // pred_check
      %p825 = pneg %p824
    $region46: #{amma_backbone_forward.1} parent=5 // pred_check_branch
      %827 = sbr.rel (%p825) target = $region48
    $region47: #{amma_backbone_forward.1} parent=5 // pred_region
      %s828 = ssub.s32 %s11, 2
      // Predicated region
      $region49: #{amma_backbone_forward.1} parent=47 // pred_check
        %p829 = pneg %p150
      $region50: #{amma_backbone_forward.1} parent=47 // pred_check_branch
        %831 = sbr.rel (%p829) target = $region52
      $region51: #{amma_backbone_forward.1} parent=47 // pred_region
        %s832 = smul.u32 16, %s17
        %p833 = scmp.lt.s32.totalorder %s832, 63
        %s834 = scalar_select %p833, %s832, 63
        %s835 = smul.addr %s834, 4
        %s836 = scalar_lea.vmem %s5, %s835
      $region52: #{amma_backbone_forward.1} parent=47 // pred_fallthru
        _
    $region48: #{amma_backbone_forward.1} parent=5 // pred_fallthru
      _
  $region6: #{amma_backbone_forward.1} parent=0 // loop_footer
    %s15 = sadd.s32 1, %s11
  $region7: #{amma_backbone_forward.1} parent=0 // loop_footer_branch
    %10 = sbr.rel target = $region3
  $region8: #{amma_backbone_forward.1} parent=0 // loop_exit
    _

</llo_original>
